<compile_context>
chip_gen: v6e
topology: v6e:2x2x1
jax: 0.10.0
libtpu: 0.0.40
codegen_flags: <defaults>
</compile_context>

<pallas_src>
import jax
import jax.numpy as jnp
from jax.experimental import pallas as pl
from jax.experimental.pallas import tpu as pltpu


def _round_up(x: int, m: int) -> int:
    return (x + m - 1) // m * m


def smooth_unit_kernel(x_ref, w_ref, b_ref, logvar_ref, eps_ref,
                       sample_ref, mu_ref):
    # mu = x @ W + b   (MXU matmul, f32 accumulate); bias row broadcasts over
    # the batch tile.
    mu = jnp.dot(x_ref[...], w_ref[...],
                 preferred_element_type=jnp.float32) + b_ref[...]
    # exp on the (1, out_feat) row once per tile; broadcasts over the batch
    # tile implicitly in the FMA below (EUP work / TILE_B vs. per-element exp).
    scale = jnp.exp(logvar_ref[...])
    # NOTE: matches torch.normal(mu, var): exp(logvar) is used directly as the
    # scale (std) of the normal, exactly like the reference module does.
    sample_ref[...] = mu + scale * eps_ref[...]
    mu_ref[...] = mu


def smooth_unit_forward(x, w, b, log_var, eps, *, tile_b: int = 512):
    """x: (B, in_feat); w: (in_feat, out_feat) (transpose of nn.Linear weight);
    b, log_var: (out_feat,) or (1, out_feat); eps: (B, out_feat) N(0,1) noise.
    Returns (sample, (mu, logvar)) with sample/mu/logvar of shape
    (B, out_feat) float32."""
    B, in_feat = x.shape
    out_feat = w.shape[-1]

    x = x.astype(jnp.float32)
    eps = eps.astype(jnp.float32)
    w = w.astype(jnp.float32)
    b = jnp.reshape(b, (1, out_feat)).astype(jnp.float32)
    log_var = jnp.reshape(log_var, (1, out_feat)).astype(jnp.float32)

    # Row tile: large enough to keep the DMA pipeline busy, multiple of 8
    # sublanes; grid collapses to 1 step for small B (minimal launch overhead).
    tb = min(_round_up(max(tile_b, 8), 8), _round_up(B, 8))
    b_pad = _round_up(B, tb)
    if b_pad != B:
        pad = b_pad - B
        x = jnp.pad(x, ((0, pad), (0, 0)))
        eps = jnp.pad(eps, ((0, pad), (0, 0)))
    grid = (b_pad // tb,)

    # VMEM budget: x + eps + sample + mu double-buffered + resident params,
    # plus headroom.  Capped well under the 32 MiB scoped default that is safe
    # on v5e / v6e / v7x (64 MiB physical on v7x).
    tile_bytes = 4 * (tb * in_feat + 3 * tb * out_feat)
    resident_bytes = 4 * (in_feat * out_feat + 2 * out_feat)
    vmem_limit = int(min(32 * 1024 * 1024,
                         max(4 * 1024 * 1024,
                             2 * tile_bytes + resident_bytes + (2 << 20))))

    out_shape = (
        jax.ShapeDtypeStruct((b_pad, out_feat), jnp.float32),  # sample
        jax.ShapeDtypeStruct((b_pad, out_feat), jnp.float32),  # mu
    )

    sample, mu = pl.pallas_call(
        smooth_unit_kernel,
        out_shape=out_shape,
        grid=grid,
        in_specs=[
            pl.BlockSpec((tb, in_feat), lambda i: (i, 0)),       # x tile
            pl.BlockSpec((in_feat, out_feat), lambda i: (0, 0)),  # W resident
            pl.BlockSpec((1, out_feat), lambda i: (0, 0)),        # b resident
            pl.BlockSpec((1, out_feat), lambda i: (0, 0)),        # log_var
            pl.BlockSpec((tb, out_feat), lambda i: (i, 0)),       # eps tile
        ],
        out_specs=(
            pl.BlockSpec((tb, out_feat), lambda i: (i, 0)),       # sample
            pl.BlockSpec((tb, out_feat), lambda i: (i, 0)),       # mu
        ),
        compiler_params=pltpu.CompilerParams(
            dimension_semantics=("parallel",),
            vmem_limit_bytes=vmem_limit,
        ),
    )(x, w, b, log_var, eps)

    if b_pad != B:
        sample = sample[:B]
        mu = mu[:B]

    # logvar is a pure broadcast of a (1, out_feat) row -- produced in the
    # wrapper instead of burning kernel output HBM bandwidth on it.
    logvar = jnp.broadcast_to(log_var, (B, out_feat))

    # Mirror the PyTorch return structure: (sample.detach(), (mu, logvar))
    return sample, (mu, logvar)


if __name__ == "__main__":
    key = jax.random.PRNGKey(0)
    B, in_feat, out_feat = 8, 32, 16
    k_w, k_b, k_lv, k_x, k_eps = jax.random.split(key, 5)

    # Deterministic parameter init (shapes from SmoothUnit.__init__):
    #   nn.Linear(in_feat, out_feat): W ~ U(-1/sqrt(in), 1/sqrt(in)) stored
    #   here as (in_feat, out_feat); bias (out,) same bound; log_var (out,)
    #   ~ U(-1, 1).
    bound = in_feat ** -0.5
    w = jax.random.uniform(k_w, (in_feat, out_feat), jnp.float32, -bound, bound)
    b = jax.random.uniform(k_b, (out_feat,), jnp.float32, -bound, bound)
    log_var = jax.random.uniform(k_lv, (out_feat,), jnp.float32, -1.0, 1.0)

    x = jax.random.normal(k_x, (B, in_feat), dtype=jnp.float32)
    eps = jax.random.normal(k_eps, (B, out_feat), dtype=jnp.float32)

    sample, (mu, logvar) = smooth_unit_forward(x, w, b, log_var, eps)
    jax.block_until_ready((sample, mu, logvar))

    # Pure-JAX reference check.
    mu_ref = x @ w + b[None, :]
    sample_ref = mu_ref + jnp.exp(log_var)[None, :] * eps
    assert sample.shape == (B, out_feat)
    assert mu.shape == (B, out_feat)
    assert logvar.shape == (B, out_feat)
    assert jnp.allclose(mu, mu_ref, atol=1e-5, rtol=1e-5)
    assert jnp.allclose(sample, sample_ref, atol=1e-5, rtol=1e-5)
    assert jnp.allclose(logvar, jnp.broadcast_to(log_var, (B, out_feat)))

    # Exercise the multi-tile grid + batch-padding path (grid > 1).
    B2 = 20
    k_x2, k_e2 = jax.random.split(jax.random.PRNGKey(1), 2)
    x2 = jax.random.normal(k_x2, (B2, in_feat), dtype=jnp.float32)
    eps2 = jax.random.normal(k_e2, (B2, out_feat), dtype=jnp.float32)
    s2, (m2, lv2) = smooth_unit_forward(x2, w, b, log_var, eps2, tile_b=8)
    jax.block_until_ready((s2, m2, lv2))
    m2_ref = x2 @ w + b[None, :]
    s2_ref = m2_ref + jnp.exp(log_var)[None, :] * eps2
    assert s2.shape == (B2, out_feat) and m2.shape == (B2, out_feat)
    assert jnp.allclose(m2, m2_ref, atol=1e-5, rtol=1e-5)
    assert jnp.allclose(s2, s2_ref, atol=1e-5, rtol=1e-5)

    print("KERNEL_OK")
</pallas_src>

<mosaic_0001>
module attributes {stable_mosaic.version = 11 : i64} {
  func.func @smooth_unit_kernel(%arg0: i32, %arg1: memref<8x32xf32, #tpu.memory_space<vmem>>, %arg2: memref<32x16xf32, #tpu.memory_space<vmem>>, %arg3: memref<1x16xf32, #tpu.memory_space<vmem>>, %arg4: memref<1x16xf32, #tpu.memory_space<vmem>>, %arg5: memref<8x16xf32, #tpu.memory_space<vmem>>, %arg6: memref<8x16xf32, #tpu.memory_space<vmem>>, %arg7: memref<8x16xf32, #tpu.memory_space<vmem>>) attributes {dimension_semantics = [#tpu.dimension_semantics<parallel>], iteration_bounds = array<i64: 1>, scalar_prefetch = 0 : i64, scratch_operands = 0 : i64, tpu.core_type = #tpu.core_type<tc>, window_params = [{transform_indices = @transform_0, window_bounds = array<i64: 8, 32>}, {pipeline_mode = #tpu.pipeline_mode<synchronous>, transform_indices = @transform_1, window_bounds = array<i64: 32, 16>}, {pipeline_mode = #tpu.pipeline_mode<synchronous>, transform_indices = @transform_2, window_bounds = array<i64: 1, 16>}, {pipeline_mode = #tpu.pipeline_mode<synchronous>, transform_indices = @transform_3, window_bounds = array<i64: 1, 16>}, {transform_indices = @transform_4, window_bounds = array<i64: 8, 16>}, {transform_indices = @transform_5, window_bounds = array<i64: 8, 16>}, {transform_indices = @transform_6, window_bounds = array<i64: 8, 16>}]} {
    %c0 = arith.constant 0 : index
    %c0_0 = arith.constant 0 : index
    %0 = vector.load %arg1[%c0, %c0_0] : memref<8x32xf32, #tpu.memory_space<vmem>>, vector<8x32xf32>
    %c0_1 = arith.constant 0 : index
    %c0_2 = arith.constant 0 : index
    %1 = vector.load %arg2[%c0_1, %c0_2] : memref<32x16xf32, #tpu.memory_space<vmem>>, vector<32x16xf32>
    %cst = arith.constant dense<0.000000e+00> : vector<8x16xf32>
    %2 = tpu.matmul %0, %1, %cst {dimension_numbers = #tpu.dot_dimension_numbers<[1], [0], [0], [1], [0, 0, 1, 1], [], []>} : vector<8x32xf32>, vector<32x16xf32>, vector<8x16xf32> -> vector<8x16xf32>
    %c0_3 = arith.constant 0 : index
    %c0_4 = arith.constant 0 : index
    %3 = vector.load %arg3[%c0_3, %c0_4] : memref<1x16xf32, #tpu.memory_space<vmem>>, vector<1x16xf32>
    %4 = vector.broadcast %3 : vector<1x16xf32> to vector<8x16xf32>
    %5 = arith.addf %2, %4 : vector<8x16xf32>
    %c0_5 = arith.constant 0 : index
    %c0_6 = arith.constant 0 : index
    %6 = vector.load %arg4[%c0_5, %c0_6] : memref<1x16xf32, #tpu.memory_space<vmem>>, vector<1x16xf32>
    %7 = math.exp %6 : vector<1x16xf32>
    %c0_7 = arith.constant 0 : index
    %c0_8 = arith.constant 0 : index
    %8 = vector.load %arg5[%c0_7, %c0_8] : memref<8x16xf32, #tpu.memory_space<vmem>>, vector<8x16xf32>
    %9 = vector.broadcast %7 : vector<1x16xf32> to vector<8x16xf32>
    %10 = arith.mulf %9, %8 : vector<8x16xf32>
    %11 = arith.addf %5, %10 : vector<8x16xf32>
    %c0_9 = arith.constant 0 : index
    %c0_10 = arith.constant 0 : index
    %12 = vector.load %arg6[%c0_9, %c0_10] : memref<8x16xf32, #tpu.memory_space<vmem>>, vector<8x16xf32>
    tpu.vector_store %arg6[%c0_9, %c0_10], %11 {strides = array<i32>} : memref<8x16xf32, #tpu.memory_space<vmem>>, vector<8x16xf32>,
    %c0_11 = arith.constant 0 : index
    %c0_12 = arith.constant 0 : index
    %13 = vector.load %arg7[%c0_11, %c0_12] : memref<8x16xf32, #tpu.memory_space<vmem>>, vector<8x16xf32>
    tpu.vector_store %arg7[%c0_11, %c0_12], %5 {strides = array<i32>} : memref<8x16xf32, #tpu.memory_space<vmem>>, vector<8x16xf32>,
    return
  }
  func.func @transform_0(%arg0: i32) -> (i32, i32) {
    %c0_i32 = arith.constant 0 : i32
    %c0_i32_0 = arith.constant 0 : i32
    return %arg0, %c0_i32 : i32, i32
  }
  func.func @transform_1(%arg0: i32) -> (i32, i32) {
    %c0_i32 = arith.constant 0 : i32
    %c0_i32_0 = arith.constant 0 : i32
    %c0_i32_1 = arith.constant 0 : i32
    return %c0_i32, %c0_i32_0 : i32, i32
  }
  func.func @transform_2(%arg0: i32) -> (i32, i32) {
    %c0_i32 = arith.constant 0 : i32
    %c0_i32_0 = arith.constant 0 : i32
    %c0_i32_1 = arith.constant 0 : i32
    return %c0_i32, %c0_i32_0 : i32, i32
  }
  func.func @transform_3(%arg0: i32) -> (i32, i32) {
    %c0_i32 = arith.constant 0 : i32
    %c0_i32_0 = arith.constant 0 : i32
    %c0_i32_1 = arith.constant 0 : i32
    return %c0_i32, %c0_i32_0 : i32, i32
  }
  func.func @transform_4(%arg0: i32) -> (i32, i32) {
    %c0_i32 = arith.constant 0 : i32
    %c0_i32_0 = arith.constant 0 : i32
    return %arg0, %c0_i32 : i32, i32
  }
  func.func @transform_5(%arg0: i32) -> (i32, i32) {
    %c0_i32 = arith.constant 0 : i32
    %c0_i32_0 = arith.constant 0 : i32
    return %arg0, %c0_i32 : i32, i32
  }
  func.func @transform_6(%arg0: i32) -> (i32, i32) {
    %c0_i32 = arith.constant 0 : i32
    %c0_i32_0 = arith.constant 0 : i32
    return %arg0, %c0_i32 : i32, i32
  }
}

</mosaic_0001>

<llo_original>
// kernel: tpu_custom_call.1
$region0: #{tpu_custom_call.1}
  #allocation0 [shape = 'u32[]', space=smem, size = 0x4, offset = 0x4, fixed_abs, tag = 'smem constant byte address 0x4 - core index']
  #allocation1 [shape = 'u32[144,128]{1,0:T(1,128)}', space=vmem, size = 0x12000, scoped, tag = 'internal scratch']
  %s0 = inlined_call_operand.vmem [shape: f32[8,32], index: 0, kind: input, shape index: {}]
  %s1 = inlined_call_operand.vmem [shape: f32[32,16], index: 1, kind: input, shape index: {}]
  %s2 = inlined_call_operand.vmem [shape: f32[1,16], index: 2, kind: input, shape index: {}]
  %s3 = inlined_call_operand.vmem [shape: f32[1,16], index: 3, kind: input, shape index: {}]
  %s4 = inlined_call_operand.vmem [shape: f32[8,16], index: 4, kind: input, shape index: {}]
  %s5 = inlined_call_operand.hbm [shape: f32[8,16], index: 5, kind: output, shape index: {0}]
  %s6 = inlined_call_operand.hbm [shape: f32[8,16], index: 6, kind: output, shape index: {1}]
  %7 = xla_tuple %s5, %s6
  %s8 = sld [smem:[#allocation0]]
  $region38: #{tpu_custom_call.1} parent=0
    _
  %s10 = ssub.s32 1, %s8
  %s11 = scalar_select 0, %s10, %s8
  $region1: #{tpu_custom_call.1} parent=0
    #allocation2 [shape = 'u8[4096]{0}', space=vmem, size = 0x1000, scoped, tag = 'output window, operand 0, single buffered']
    #allocation3 [shape = 's32[1]{0}', space=sflag, size = 0x4, scoped, tag = 'scoped memory for tpu_custom_call.1']
    #allocation4 [shape = 'u8[4096]{0}', space=vmem, size = 0x1000, scoped, tag = 'output window, operand 1, single buffered']
    #allocation5 [shape = 's32[1]{0}', space=sflag, size = 0x4, scoped, tag = 'scoped memory for tpu_custom_call.1']
    %12 = vsyncpa [#allocation3], 0
    %13 = vsyncpa [#allocation5], 0
    // Predicated region
    $region2: #{tpu_custom_call.1} parent=1 // pred_check
      _
    $region3: #{tpu_custom_call.1} parent=1 // pred_check_branch
      %15 = sbr.rel (0) target = $region5
    $region4: #{tpu_custom_call.1} parent=1 // pred_region
      _
    $region5: #{tpu_custom_call.1} parent=1 // pred_fallthru
      _
    // Predicated region
    $region6: #{tpu_custom_call.1} parent=1 // pred_check
      _
    $region7: #{tpu_custom_call.1} parent=1 // pred_check_branch
      %17 = sbr.rel (0) target = $region9
    $region8: #{tpu_custom_call.1} parent=1 // pred_region
      _
    $region9: #{tpu_custom_call.1} parent=1 // pred_fallthru
      _
    // Predicated region
    $region10: #{tpu_custom_call.1} parent=1 // pred_check
      _
    $region11: #{tpu_custom_call.1} parent=1 // pred_check_branch
      %19 = sbr.rel (0) target = $region13
    $region12: #{tpu_custom_call.1} parent=1 // pred_region
      _
    $region13: #{tpu_custom_call.1} parent=1 // pred_fallthru
      _
    // Predicated region
    $region14: #{tpu_custom_call.1} parent=1 // pred_check
      _
    $region15: #{tpu_custom_call.1} parent=1 // pred_check_branch
      %21 = sbr.rel (0) target = $region17
    $region16: #{tpu_custom_call.1} parent=1 // pred_region
      _
    $region17: #{tpu_custom_call.1} parent=1 // pred_fallthru
      _
    // Predicated region
    $region18: #{tpu_custom_call.1} parent=1 // pred_check
      _
    $region19: #{tpu_custom_call.1} parent=1 // pred_check_branch
      %23 = sbr.rel (0) target = $region21
    $region20: #{tpu_custom_call.1} parent=1 // pred_region
      _
    $region21: #{tpu_custom_call.1} parent=1 // pred_fallthru
      _
    %v24 = vld [vmem:[%s0] sm:$0xff]
    %v25 = vld [vmem:[%s1] sm:$0xff]
    %v26 = vld [vmem:[%s1 + $0x8] sm:$0xff]
    %v27 = vld [vmem:[%s1 + $0x10] sm:$0xff]
    %v28 = vld [vmem:[%s1 + $0x18] sm:$0xff]
    %v29 = vld [vmem:[%s2] sm:$0x1]
    %v31 = vlaneseq
    %v32 = vshrl.u32 %v31, 7
    %v33 = vsub.s32 0, %v32
    %v34 = vrot.slane %v29, %v33
    %vm36 = vcmask 261120
    %v38 = vsel %vm36, %v24, 0
    %40 = vmatprep.subr.mxu0 0.0
    %41 = vmatpush1.msra.mxu0 0.0
    %42 = vmatprep.subr.mxu0 0.0
    %43 = vmatpush1.msra.mxu0 0.0
    %44 = vmatprep.subr.mxu0 0.0
    %45 = vmatpush1.msra.mxu0 0.0
    %46 = vmatprep.subr.mxu0 0.0
    %47 = vmatpush1.msra.mxu0 0.0
    %48 = vmatprep.subr.mxu0 0.0
    %49 = vmatpush1.msra.mxu0 0.0
    %50 = vmatprep.subr.mxu0 0.0
    %51 = vmatpush1.msra.mxu0 0.0
    %52 = vmatprep.subr.mxu0 0.0
    %53 = vmatpush1.msra.mxu0 0.0
    %54 = vmatprep.subr.mxu0 0.0
    %55 = vmatpush1.msra.mxu0 0.0
    %56 = vmatprep.subr.mxu0 0.0
    %57 = vmatpush1.msra.mxu0 0.0
    %58 = vmatprep.subr.mxu0 0.0
    %59 = vmatpush1.msra.mxu0 0.0
    %60 = vmatprep.subr.mxu0 0.0
    %61 = vmatpush1.msra.mxu0 0.0
    %62 = vmatprep.subr.mxu0 0.0
    %63 = vmatpush1.msra.mxu0 0.0
    %64 = vmatprep.subr.mxu0 0.0
    %65 = vmatpush1.msra.mxu0 %v28
    %66 = vmatprep.subr.mxu0 0.0
    %67 = vmatpush1.msra.mxu0 %v27
    %68 = vmatprep.subr.mxu0 0.0
    %69 = vmatpush1.msra.mxu0 %v26
    %70 = vmatprep.subr.mxu0 0.0
    %71 = vmatpush1.msra.mxu0 %v25
    %72 = vmatprep.subr.mxu0 0.0
    %73 = vmatpush2.msra.mxu0 0.0
    %74 = vmatprep.subr.mxu0 0.0
    %75 = vmatpush2.msra.mxu0 0.0
    %76 = vmatprep.subr.mxu0 0.0
    %77 = vmatpush2.msra.mxu0 0.0
    %78 = vmatprep.subr.mxu0 0.0
    %79 = vmatpush2.msra.mxu0 0.0
    %80 = vmatprep.subr.mxu0 0.0
    %81 = vmatpush2.msra.mxu0 0.0
    %82 = vmatprep.subr.mxu0 0.0
    %83 = vmatpush2.msra.mxu0 0.0
    %84 = vmatprep.subr.mxu0 0.0
    %85 = vmatpush2.msra.mxu0 0.0
    %86 = vmatprep.subr.mxu0 0.0
    %87 = vmatpush2.msra.mxu0 0.0
    %88 = vmatprep.subr.mxu0 0.0
    %89 = vmatpush2.msra.mxu0 0.0
    %90 = vmatprep.subr.mxu0 0.0
    %91 = vmatpush2.msra.mxu0 0.0
    %92 = vmatprep.subr.mxu0 0.0
    %93 = vmatpush2.msra.mxu0 0.0
    %94 = vmatprep.subr.mxu0 0.0
    %95 = vmatpush2.msra.mxu0 0.0
    %96 = vmatprep.subr.mxu0 0.0
    %97 = vmatpush2.msra.mxu0 0.0
    %98 = vmatprep.subr.mxu0 0.0
    %99 = vmatpush2.msra.mxu0 0.0
    %100 = vmatprep.subr.mxu0 0.0
    %101 = vmatpush2.msra.mxu0 0.0
    %102 = vmatprep.subr.mxu0 0.0
    %103 = vmatpush2.msra.mxu0 0.0
    %104 = vmatprep.mubr.f32.mxu0 0.0
    %105 = vmatmul.mubr.f32.gmra.mxu0 %v38
    %v106 = vpop.f32.mrf.mxu0
    %v107 = vadd.f32 %v34, %v106
    %v108 = vpop.f32.mrf.mxu0
    %109 = vdwg.mxu0
    %v110 = vld [vmem:[%s3] sm:$0x1]
    %v111 = vmul.f32 %v110, 1.442695
    %v112 = vpow.pop %v111
    %v113 = vld [vmem:[%s4] sm:$0xff]
    %v115 = vlaneseq
    %v116 = vshrl.u32 %v115, 7
    %v117 = vsub.s32 0, %v116
    %v118 = vrot.slane %v112, %v117
    %v120 = vmul.f32 %v118, %v113
    %v121 = vadd.f32 %v107, %v120
    %vm122 = vcmask 130048
    %123 = vst.msk [vmem:[#allocation2] sm:$0xff] %vm122, %v121
    %124 = vst.msk [vmem:[#allocation4] sm:$0xff] %vm122, %v107
    // Predicated region
    $region22: #{tpu_custom_call.1} parent=1 // pred_check
      _
    $region23: #{tpu_custom_call.1} parent=1 // pred_check_branch
      %126 = sbr.rel (0) target = $region25
    $region24: #{tpu_custom_call.1} parent=1 // pred_region
      %s128 = ssub.s32 128, 128
      %129 = vsyncadd [#allocation3], %s128
      %s131 = sshll.u32 [#allocation2], 4
      %s132 = int_to_ptr.vmem [resolvable:$true] %s131
      %134 = dma.vmem_to_hbm [thread:$0]  %s132, 128, %s5, [#allocation3]
    $region25: #{tpu_custom_call.1} parent=1 // pred_fallthru
      _
    // Predicated region
    $region26: #{tpu_custom_call.1} parent=1 // pred_check
      _
    $region27: #{tpu_custom_call.1} parent=1 // pred_check_branch
      %136 = sbr.rel (0) target = $region29
    $region28: #{tpu_custom_call.1} parent=1 // pred_region
      %s138 = ssub.s32 128, 128
      %139 = vsyncadd [#allocation5], %s138
      %s141 = sshll.u32 [#allocation4], 4
      %s142 = int_to_ptr.vmem [resolvable:$true] %s141
      %144 = dma.vmem_to_hbm [thread:$0]  %s142, 128, %s6, [#allocation5]
    $region29: #{tpu_custom_call.1} parent=1 // pred_fallthru
      _
    // Predicated region
    $region30: #{tpu_custom_call.1} parent=1 // pred_check
      _
    $region31: #{tpu_custom_call.1} parent=1 // pred_check_branch
      %146 = sbr.rel (0) target = $region33
    $region32: #{tpu_custom_call.1} parent=1 // pred_region
      %147 = dma.done [#allocation3], 128
    $region33: #{tpu_custom_call.1} parent=1 // pred_fallthru
      _
    // Predicated region
    $region34: #{tpu_custom_call.1} parent=1 // pred_check
      _
    $region35: #{tpu_custom_call.1} parent=1 // pred_check_branch
      %149 = sbr.rel (0) target = $region37
    $region36: #{tpu_custom_call.1} parent=1 // pred_region
      %150 = dma.done [#allocation5], 128
    $region37: #{tpu_custom_call.1} parent=1 // pred_fallthru
      _
    %151 = vsyncpa [#allocation3], 1
    %152 = vsyncpa [#allocation5], 1

</llo_original>
